<compile_context>
chip_gen: v6e
topology: v6e:2x2x1
jax: 0.10.0
libtpu: 0.0.40
codegen_flags: <defaults>
</compile_context>

<pallas_src>
import functools

import jax
import jax.numpy as jnp
from jax.experimental import pallas as pl
from jax.experimental.pallas import tpu as pltpu


def _round_up(x, m):
    return ((x + m - 1) // m) * m


def value_net_kernel(x_ref,
                     w1_ref, b1_ref,
                     w2_ref, b2_ref,
                     w3_ref, b3_ref,
                     w4_ref, b4_ref,
                     out_ref):
    # Fused hot path: 4 matmuls + bias adds + 3 ReLUs, all in VMEM.
    # Dots run in the weight dtype (bf16 by default) with f32 MXU accumulation;
    # bias add / ReLU stay in f32 (portable to v5e, no bf16 VPU needed).
    x = x_ref[...]
    h = jnp.dot(x.astype(w1_ref.dtype), w1_ref[...],
                preferred_element_type=jnp.float32) + b1_ref[...]
    h = jnp.maximum(h, 0.0)
    h = jnp.dot(h.astype(w2_ref.dtype), w2_ref[...],
                preferred_element_type=jnp.float32) + b2_ref[...]
    h = jnp.maximum(h, 0.0)
    h = jnp.dot(h.astype(w3_ref.dtype), w3_ref[...],
                preferred_element_type=jnp.float32) + b3_ref[...]
    h = jnp.maximum(h, 0.0)
    y = jnp.dot(h.astype(w4_ref.dtype), w4_ref[...],
                preferred_element_type=jnp.float32) + b4_ref[...]
    out_ref[...] = y.astype(out_ref.dtype)   # narrow (tb, output_dim) store


def prepare_params(params, compute_dtype=jnp.bfloat16):
    """One-time (outside the per-call path) cast of weights to the MXU dtype.

    bf16 weights avoid the multi-pass f32 MXU emulation (~3x compute) and halve
    resident weight VMEM.  Biases stay f32 (added post-accumulation).
    # TODO(synk): on v7x, an fp8 weight path (f32 accumulate) would roughly
    # double MXU throughput again; needs a looser-tolerance validation.
    """
    prepared = {}
    for i in range(1, 5):
        prepared[f"w{i}"] = params[f"w{i}"].astype(compute_dtype)
        prepared[f"b{i}"] = params[f"b{i}"].astype(jnp.float32)
    return prepared


@functools.partial(jax.jit, static_argnames=("block_b",))
def value_network_forward(x, params, block_b=4096):
    """x: [B, input_dim] float32.  params: output of prepare_params()."""
    B, input_dim = x.shape
    output_dim = params["w4"].shape[1]

    # ---- batch tiling -----------------------------------------------------
    # x stays f32 in HBM (cast to the weight dtype happens in-kernel), so the
    # sublane granule is 8.  Cap tb at ceil(B/2) so the grid has >=2 steps and
    # both v7x TensorCores get a share of the ("parallel",) batch axis.
    sublane = 8
    tb = min(block_b, _round_up(pl.cdiv(B, 2), sublane))
    tb = max(sublane, _round_up(tb, sublane))
    grid = (pl.cdiv(B, tb),)   # ragged last block handled by Pallas (no jnp.pad)

    def resident(arr):
        # Constant block index -> DMA'd once, stays resident in VMEM (~25 KB bf16).
        # Note: could be single-buffered (pipeline_mode=pl.Buffered(1)) for a tiny
        # extra VMEM win; left at the default for compile safety.
        return pl.BlockSpec(arr.shape, lambda i: (0, 0))

    # ---- VMEM budget: every (tb, F<=128) f32 buffer is lane-padded to 128
    # lanes in VMEM -> ~tb*512 B each.  2x in-buffers + 2x out-buffers +
    # ~3 intermediates + weights + headroom, clamped well below v7x's 64 MiB.
    vmem_bytes = int(min(max(10 * tb * 512 + (1 << 20), 16 << 20), 48 << 20))

    out = pl.pallas_call(
        value_net_kernel,
        out_shape=jax.ShapeDtypeStruct((B, output_dim), jnp.float32),
        grid_spec=pltpu.PrefetchScalarGridSpec(
            num_scalar_prefetch=0,
            grid=grid,
            in_specs=[
                pl.BlockSpec((tb, input_dim), lambda i: (i, 0)),   # x tile (pipelined)
                resident(params["w1"]), resident(params["b1"]),
                resident(params["w2"]), resident(params["b2"]),
                resident(params["w3"]), resident(params["b3"]),
                resident(params["w4"]), resident(params["b4"]),
            ],
            # Narrow, unpadded output tile: only output_dim useful columns hit HBM.
            out_specs=pl.BlockSpec((tb, output_dim), lambda i: (i, 0)),
        ),
        compiler_params=pltpu.CompilerParams(
            dimension_semantics=("parallel",),   # batch axis shards across TCs (v7x)
            vmem_limit_bytes=vmem_bytes,
        ),
    )(x,
      params["w1"], params["b1"],
      params["w2"], params["b2"],
      params["w3"], params["b3"],
      params["w4"], params["b4"])

    return out


def init_params(key, input_dim, output_dim):
    """Deterministic init mirroring torch.nn.Linear default (U[-1/sqrt(in), 1/sqrt(in)])."""
    dims = [(input_dim, 128), (128, 64), (64, 32), (32, output_dim)]
    params = {}
    for i, (fin, fout) in enumerate(dims, start=1):
        key, kw, kb = jax.random.split(key, 3)
        bound = 1.0 / jnp.sqrt(fin)
        # Stored as [in, out] so the kernel does x @ W.
        params[f"w{i}"] = jax.random.uniform(
            kw, (fin, fout), dtype=jnp.float32, minval=-bound, maxval=bound)
        params[f"b{i}"] = jax.random.uniform(
            kb, (1, fout), dtype=jnp.float32, minval=-bound, maxval=bound)
    return params


def reference_forward(x, params):
    h = jnp.maximum(x @ params["w1"] + params["b1"], 0.0)
    h = jnp.maximum(h @ params["w2"] + params["b2"], 0.0)
    h = jnp.maximum(h @ params["w3"] + params["b3"], 0.0)
    return h @ params["w4"] + params["b4"]


if __name__ == "__main__":
    key = jax.random.PRNGKey(0)
    key, kx, kp, kx2 = jax.random.split(key, 4)

    input_dim = 16
    output_dim = 4
    params_f32 = init_params(kp, input_dim, output_dim)
    ref_fn = jax.jit(reference_forward)

    # Pre-cast once (outside the per-call path).
    params_bf16 = prepare_params(params_f32, jnp.bfloat16)   # default MXU path
    params_full = prepare_params(params_f32, jnp.float32)    # exact-f32 path

    # --- Small-shape run (single tile), bf16 default path, loose tolerance.
    batch = 8
    x = jax.random.normal(kx, (batch, input_dim), dtype=jnp.float32)
    out = jax.block_until_ready(value_network_forward(x, params_bf16))
    ref = ref_fn(x, params_f32)
    assert out.shape == (batch, output_dim)
    assert jnp.allclose(out, ref, atol=5e-2, rtol=5e-2), "bf16 mismatch vs f32 reference (B=8)"

    # --- Same shape, f32-weight path, tight tolerance.
    out_f32 = jax.block_until_ready(value_network_forward(x, params_full))
    assert jnp.allclose(out_f32, ref, atol=1e-5, rtol=1e-5), "f32 mismatch vs reference (B=8)"

    # --- Multi-tile + ragged last block (grid of 2, B not a tile multiple).
    batch2 = 100
    x2 = jax.random.normal(kx2, (batch2, input_dim), dtype=jnp.float32)
    out2 = jax.block_until_ready(value_network_forward(x2, params_bf16, block_b=64))
    ref2 = ref_fn(x2, params_f32)
    assert out2.shape == (batch2, output_dim)
    assert jnp.allclose(out2, ref2, atol=5e-2, rtol=5e-2), "bf16 mismatch (B=100, ragged)"

    out2_f32 = jax.block_until_ready(value_network_forward(x2, params_full, block_b=64))
    assert jnp.allclose(out2_f32, ref2, atol=1e-5, rtol=1e-5), "f32 mismatch (B=100, ragged)"

    print("KERNEL_OK")
</pallas_src>

<mosaic_0001>
module attributes {stable_mosaic.version = 11 : i64} {
  func.func @value_net_kernel(%arg0: i32, %arg1: memref<8x16xf32, #tpu.memory_space<vmem>>, %arg2: memref<16x128xbf16, #tpu.memory_space<vmem>>, %arg3: memref<1x128xf32, #tpu.memory_space<vmem>>, %arg4: memref<128x64xbf16, #tpu.memory_space<vmem>>, %arg5: memref<1x64xf32, #tpu.memory_space<vmem>>, %arg6: memref<64x32xbf16, #tpu.memory_space<vmem>>, %arg7: memref<1x32xf32, #tpu.memory_space<vmem>>, %arg8: memref<32x4xbf16, #tpu.memory_space<vmem>>, %arg9: memref<1x4xf32, #tpu.memory_space<vmem>>, %arg10: memref<8x4xf32, #tpu.memory_space<vmem>>) attributes {dimension_semantics = [#tpu.dimension_semantics<parallel>], iteration_bounds = array<i64: 1>, scalar_prefetch = 0 : i64, scratch_operands = 0 : i64, tpu.core_type = #tpu.core_type<tc>, window_params = [{transform_indices = @transform_0, window_bounds = array<i64: 8, 16>}, {pipeline_mode = #tpu.pipeline_mode<synchronous>, transform_indices = @transform_1, window_bounds = array<i64: 16, 128>}, {pipeline_mode = #tpu.pipeline_mode<synchronous>, transform_indices = @transform_2, window_bounds = array<i64: 1, 128>}, {pipeline_mode = #tpu.pipeline_mode<synchronous>, transform_indices = @transform_3, window_bounds = array<i64: 128, 64>}, {pipeline_mode = #tpu.pipeline_mode<synchronous>, transform_indices = @transform_4, window_bounds = array<i64: 1, 64>}, {pipeline_mode = #tpu.pipeline_mode<synchronous>, transform_indices = @transform_5, window_bounds = array<i64: 64, 32>}, {pipeline_mode = #tpu.pipeline_mode<synchronous>, transform_indices = @transform_6, window_bounds = array<i64: 1, 32>}, {pipeline_mode = #tpu.pipeline_mode<synchronous>, transform_indices = @transform_7, window_bounds = array<i64: 32, 4>}, {pipeline_mode = #tpu.pipeline_mode<synchronous>, transform_indices = @transform_8, window_bounds = array<i64: 1, 4>}, {transform_indices = @transform_9, window_bounds = array<i64: 8, 4>}]} {
    %c0 = arith.constant 0 : index
    %c0_0 = arith.constant 0 : index
    %0 = vector.load %arg1[%c0, %c0_0] : memref<8x16xf32, #tpu.memory_space<vmem>>, vector<8x16xf32>
    %1 = arith.truncf %0 : vector<8x16xf32> to vector<8x16xbf16>
    %c0_1 = arith.constant 0 : index
    %c0_2 = arith.constant 0 : index
    %2 = vector.load %arg2[%c0_1, %c0_2] : memref<16x128xbf16, #tpu.memory_space<vmem>>, vector<16x128xbf16>
    %cst = arith.constant dense<0.000000e+00> : vector<8x128xf32>
    %3 = tpu.matmul %1, %2, %cst {dimension_numbers = #tpu.dot_dimension_numbers<[1], [0], [0], [1], [0, 0, 1, 1], [], []>} : vector<8x16xbf16>, vector<16x128xbf16>, vector<8x128xf32> -> vector<8x128xf32>
    %c0_3 = arith.constant 0 : index
    %c0_4 = arith.constant 0 : index
    %4 = vector.load %arg3[%c0_3, %c0_4] : memref<1x128xf32, #tpu.memory_space<vmem>>, vector<1x128xf32>
    %5 = vector.broadcast %4 : vector<1x128xf32> to vector<8x128xf32>
    %6 = arith.addf %3, %5 : vector<8x128xf32>
    %cst_5 = arith.constant 0.000000e+00 : f32
    %7 = vector.broadcast %cst_5 : f32 to vector<8x128xf32>
    %8 = arith.maximumf %6, %7 : vector<8x128xf32>
    %9 = arith.truncf %8 : vector<8x128xf32> to vector<8x128xbf16>
    %c0_6 = arith.constant 0 : index
    %c0_7 = arith.constant 0 : index
    %10 = vector.load %arg4[%c0_6, %c0_7] : memref<128x64xbf16, #tpu.memory_space<vmem>>, vector<128x64xbf16>
    %cst_8 = arith.constant dense<0.000000e+00> : vector<8x64xf32>
    %11 = tpu.matmul %9, %10, %cst_8 {dimension_numbers = #tpu.dot_dimension_numbers<[1], [0], [0], [1], [0, 0, 1, 1], [], []>} : vector<8x128xbf16>, vector<128x64xbf16>, vector<8x64xf32> -> vector<8x64xf32>
    %c0_9 = arith.constant 0 : index
    %c0_10 = arith.constant 0 : index
    %12 = vector.load %arg5[%c0_9, %c0_10] : memref<1x64xf32, #tpu.memory_space<vmem>>, vector<1x64xf32>
    %13 = vector.broadcast %12 : vector<1x64xf32> to vector<8x64xf32>
    %14 = arith.addf %11, %13 : vector<8x64xf32>
    %cst_11 = arith.constant 0.000000e+00 : f32
    %15 = vector.broadcast %cst_11 : f32 to vector<8x64xf32>
    %16 = arith.maximumf %14, %15 : vector<8x64xf32>
    %17 = arith.truncf %16 : vector<8x64xf32> to vector<8x64xbf16>
    %c0_12 = arith.constant 0 : index
    %c0_13 = arith.constant 0 : index
    %18 = vector.load %arg6[%c0_12, %c0_13] : memref<64x32xbf16, #tpu.memory_space<vmem>>, vector<64x32xbf16>
    %cst_14 = arith.constant dense<0.000000e+00> : vector<8x32xf32>
    %19 = tpu.matmul %17, %18, %cst_14 {dimension_numbers = #tpu.dot_dimension_numbers<[1], [0], [0], [1], [0, 0, 1, 1], [], []>} : vector<8x64xbf16>, vector<64x32xbf16>, vector<8x32xf32> -> vector<8x32xf32>
    %c0_15 = arith.constant 0 : index
    %c0_16 = arith.constant 0 : index
    %20 = vector.load %arg7[%c0_15, %c0_16] : memref<1x32xf32, #tpu.memory_space<vmem>>, vector<1x32xf32>
    %21 = vector.broadcast %20 : vector<1x32xf32> to vector<8x32xf32>
    %22 = arith.addf %19, %21 : vector<8x32xf32>
    %cst_17 = arith.constant 0.000000e+00 : f32
    %23 = vector.broadcast %cst_17 : f32 to vector<8x32xf32>
    %24 = arith.maximumf %22, %23 : vector<8x32xf32>
    %25 = arith.truncf %24 : vector<8x32xf32> to vector<8x32xbf16>
    %c0_18 = arith.constant 0 : index
    %c0_19 = arith.constant 0 : index
    %26 = vector.load %arg8[%c0_18, %c0_19] : memref<32x4xbf16, #tpu.memory_space<vmem>>, vector<32x4xbf16>
    %cst_20 = arith.constant dense<0.000000e+00> : vector<8x4xf32>
    %27 = tpu.matmul %25, %26, %cst_20 {dimension_numbers = #tpu.dot_dimension_numbers<[1], [0], [0], [1], [0, 0, 1, 1], [], []>} : vector<8x32xbf16>, vector<32x4xbf16>, vector<8x4xf32> -> vector<8x4xf32>
    %c0_21 = arith.constant 0 : index
    %c0_22 = arith.constant 0 : index
    %28 = vector.load %arg9[%c0_21, %c0_22] : memref<1x4xf32, #tpu.memory_space<vmem>>, vector<1x4xf32>
    %29 = vector.broadcast %28 : vector<1x4xf32> to vector<8x4xf32>
    %30 = arith.addf %27, %29 : vector<8x4xf32>
    %c0_23 = arith.constant 0 : index
    %c0_24 = arith.constant 0 : index
    %31 = vector.load %arg10[%c0_23, %c0_24] : memref<8x4xf32, #tpu.memory_space<vmem>>, vector<8x4xf32>
    tpu.vector_store %arg10[%c0_23, %c0_24], %30 {strides = array<i32>} : memref<8x4xf32, #tpu.memory_space<vmem>>, vector<8x4xf32>,
    return
  }
  func.func @transform_0(%arg0: i32) -> (i32, i32) {
    %c0_i32 = arith.constant 0 : i32
    %c0_i32_0 = arith.constant 0 : i32
    return %arg0, %c0_i32 : i32, i32
  }
  func.func @transform_1(%arg0: i32) -> (i32, i32) {
    %c0_i32 = arith.constant 0 : i32
    %c0_i32_0 = arith.constant 0 : i32
    %c0_i32_1 = arith.constant 0 : i32
    return %c0_i32, %c0_i32_0 : i32, i32
  }
  func.func @transform_2(%arg0: i32) -> (i32, i32) {
    %c0_i32 = arith.constant 0 : i32
    %c0_i32_0 = arith.constant 0 : i32
    %c0_i32_1 = arith.constant 0 : i32
    return %c0_i32, %c0_i32_0 : i32, i32
  }
  func.func @transform_3(%arg0: i32) -> (i32, i32) {
    %c0_i32 = arith.constant 0 : i32
    %c0_i32_0 = arith.constant 0 : i32
    %c0_i32_1 = arith.constant 0 : i32
    return %c0_i32, %c0_i32_0 : i32, i32
  }
  func.func @transform_4(%arg0: i32) -> (i32, i32) {
    %c0_i32 = arith.constant 0 : i32
    %c0_i32_0 = arith.constant 0 : i32
    %c0_i32_1 = arith.constant 0 : i32
    return %c0_i32, %c0_i32_0 : i32, i32
  }
  func.func @transform_5(%arg0: i32) -> (i32, i32) {
    %c0_i32 = arith.constant 0 : i32
    %c0_i32_0 = arith.constant 0 : i32
    %c0_i32_1 = arith.constant 0 : i32
    return %c0_i32, %c0_i32_0 : i32, i32
  }
  func.func @transform_6(%arg0: i32) -> (i32, i32) {
    %c0_i32 = arith.constant 0 : i32
    %c0_i32_0 = arith.constant 0 : i32
    %c0_i32_1 = arith.constant 0 : i32
    return %c0_i32, %c0_i32_0 : i32, i32
  }
  func.func @transform_7(%arg0: i32) -> (i32, i32) {
    %c0_i32 = arith.constant 0 : i32
    %c0_i32_0 = arith.constant 0 : i32
    %c0_i32_1 = arith.constant 0 : i32
    return %c0_i32, %c0_i32_0 : i32, i32
  }
  func.func @transform_8(%arg0: i32) -> (i32, i32) {
    %c0_i32 = arith.constant 0 : i32
    %c0_i32_0 = arith.constant 0 : i32
    %c0_i32_1 = arith.constant 0 : i32
    return %c0_i32, %c0_i32_0 : i32, i32
  }
  func.func @transform_9(%arg0: i32) -> (i32, i32) {
    %c0_i32 = arith.constant 0 : i32
    %c0_i32_0 = arith.constant 0 : i32
    return %arg0, %c0_i32 : i32, i32
  }
}

</mosaic_0001>

<llo_original>
// kernel: value_network_forward.1
$region0: #{value_network_forward.1}
  #allocation0 [shape = 'u32[]', space=smem, size = 0x4, offset = 0x4, fixed_abs, tag = 'smem constant byte address 0x4 - core index']
  #allocation1 [shape = 'u32[144,128]{1,0:T(1,128)}', space=vmem, size = 0x12000, scoped, tag = 'internal scratch']
  %s0 = inlined_call_operand.vmem [shape: f32[8,16], index: 0, kind: input, shape index: {}]
  %s1 = inlined_call_operand.vmem [shape: bf16[16,128], index: 1, kind: input, shape index: {}]
  %s2 = inlined_call_operand.vmem [shape: f32[1,128], index: 2, kind: input, shape index: {}]
  %s3 = inlined_call_operand.vmem [shape: bf16[128,64], index: 3, kind: input, shape index: {}]
  %s4 = inlined_call_operand.vmem [shape: f32[1,64], index: 4, kind: input, shape index: {}]
  %s5 = inlined_call_operand.vmem [shape: bf16[64,32], index: 5, kind: input, shape index: {}]
  %s6 = inlined_call_operand.vmem [shape: f32[1,32], index: 6, kind: input, shape index: {}]
  %s7 = inlined_call_operand.vmem [shape: bf16[32,4], index: 7, kind: input, shape index: {}]
  %s8 = inlined_call_operand.vmem [shape: f32[1,4], index: 8, kind: input, shape index: {}]
  %s9 = inlined_call_operand.vmem [shape: f32[8,4], index: 9, kind: output, shape index: {}]
  %s10 = sld [smem:[#allocation0]]
  $region46: #{value_network_forward.1} parent=0
    _
  %s12 = ssub.s32 1, %s10
  %s13 = scalar_select 0, %s12, %s10
  // Predicated region
  $region2: #{value_network_forward.1} parent=0 // pred_check
    _
  $region3: #{value_network_forward.1} parent=0 // pred_check_branch
    %15 = sbr.rel (0) target = $region5
  $region4: #{value_network_forward.1} parent=0 // pred_region
    _
  $region5: #{value_network_forward.1} parent=0 // pred_fallthru
    _
  // Predicated region
  $region6: #{value_network_forward.1} parent=0 // pred_check
    _
  $region7: #{value_network_forward.1} parent=0 // pred_check_branch
    %17 = sbr.rel (0) target = $region9
  $region8: #{value_network_forward.1} parent=0 // pred_region
    _
  $region9: #{value_network_forward.1} parent=0 // pred_fallthru
    _
  // Predicated region
  $region10: #{value_network_forward.1} parent=0 // pred_check
    _
  $region11: #{value_network_forward.1} parent=0 // pred_check_branch
    %19 = sbr.rel (0) target = $region13
  $region12: #{value_network_forward.1} parent=0 // pred_region
    _
  $region13: #{value_network_forward.1} parent=0 // pred_fallthru
    _
  // Predicated region
  $region14: #{value_network_forward.1} parent=0 // pred_check
    _
  $region15: #{value_network_forward.1} parent=0 // pred_check_branch
    %21 = sbr.rel (0) target = $region17
  $region16: #{value_network_forward.1} parent=0 // pred_region
    _
  $region17: #{value_network_forward.1} parent=0 // pred_fallthru
    _
  // Predicated region
  $region18: #{value_network_forward.1} parent=0 // pred_check
    _
  $region19: #{value_network_forward.1} parent=0 // pred_check_branch
    %23 = sbr.rel (0) target = $region21
  $region20: #{value_network_forward.1} parent=0 // pred_region
    _
  $region21: #{value_network_forward.1} parent=0 // pred_fallthru
    _
  // Predicated region
  $region22: #{value_network_forward.1} parent=0 // pred_check
    _
  $region23: #{value_network_forward.1} parent=0 // pred_check_branch
    %25 = sbr.rel (0) target = $region25
  $region24: #{value_network_forward.1} parent=0 // pred_region
    _
  $region25: #{value_network_forward.1} parent=0 // pred_fallthru
    _
  // Predicated region
  $region26: #{value_network_forward.1} parent=0 // pred_check
    _
  $region27: #{value_network_forward.1} parent=0 // pred_check_branch
    %27 = sbr.rel (0) target = $region29
  $region28: #{value_network_forward.1} parent=0 // pred_region
    _
  $region29: #{value_network_forward.1} parent=0 // pred_fallthru
    _
  // Predicated region
  $region30: #{value_network_forward.1} parent=0 // pred_check
    _
  $region31: #{value_network_forward.1} parent=0 // pred_check_branch
    %29 = sbr.rel (0) target = $region33
  $region32: #{value_network_forward.1} parent=0 // pred_region
    _
  $region33: #{value_network_forward.1} parent=0 // pred_fallthru
    _
  // Predicated region
  $region34: #{value_network_forward.1} parent=0 // pred_check
    _
  $region35: #{value_network_forward.1} parent=0 // pred_check_branch
    %31 = sbr.rel (0) target = $region37
  $region36: #{value_network_forward.1} parent=0 // pred_region
    _
  $region37: #{value_network_forward.1} parent=0 // pred_fallthru
    _
  %v33 = vld [vmem:[%s0] sm:$0xff]
  %v34 = vpack.c.bf16 %v33, %v33
  %v35 = vld [vmem:[%s1] sm:$0xf]
  %v36 = vld [vmem:[%s1 + $0x4] sm:$0xf]
  %v37 = vld [vmem:[%s2] sm:$0x1]
  %v39 = vlaneseq
  %v40 = vshrl.u32 %v39, 7
  %v41 = vsub.s32 0, %v40
  %v42 = vrot.slane %v37, %v41
  %v46 = vunpack.c.l.b16 %v35
  %v47 = vunpack.c.l.b16 %v36
  %v48 = vpack.c.b16 %v47, %v46
  %vm50 = vcmask 130048
  %v52 = vsel %vm50, %v34, 0
  %54 = vmatprep.subr.bf16.mxu0 0
  %55 = vmatpush1.bf16.msra.mxu0 0
  %56 = vmatprep.subr.bf16.mxu0 0
  %57 = vmatpush1.bf16.msra.mxu0 0
  %58 = vmatprep.subr.bf16.mxu0 0
  %59 = vmatpush1.bf16.msra.mxu0 0
  %60 = vmatprep.subr.bf16.mxu0 0
  %61 = vmatpush1.bf16.msra.mxu0 0
  %62 = vmatprep.subr.bf16.mxu0 0
  %63 = vmatpush1.bf16.msra.mxu0 0
  %64 = vmatprep.subr.bf16.mxu0 0
  %65 = vmatpush1.bf16.msra.mxu0 0
  %66 = vmatprep.subr.bf16.mxu0 0
  %67 = vmatpush1.bf16.msra.mxu0 0
  %68 = vmatprep.subr.bf16.mxu0 0
  %69 = vmatpush1.bf16.msra.mxu0 %v48
  %70 = vmatprep.subr.bf16.mxu0 0
  %71 = vmatpush2.bf16.msra.mxu0 0
  %72 = vmatprep.subr.bf16.mxu0 0
  %73 = vmatpush2.bf16.msra.mxu0 0
  %74 = vmatprep.subr.bf16.mxu0 0
  %75 = vmatpush2.bf16.msra.mxu0 0
  %76 = vmatprep.subr.bf16.mxu0 0
  %77 = vmatpush2.bf16.msra.mxu0 0
  %78 = vmatprep.subr.bf16.mxu0 0
  %79 = vmatpush2.bf16.msra.mxu0 0
  %80 = vmatprep.subr.bf16.mxu0 0
  %81 = vmatpush2.bf16.msra.mxu0 0
  %82 = vmatprep.subr.bf16.mxu0 0
  %83 = vmatpush2.bf16.msra.mxu0 0
  %84 = vmatprep.subr.bf16.mxu0 0
  %85 = vmatpush2.bf16.msra.mxu0 0
  %86 = vmatprep.mubr.bf16.mxu0 0
  %87 = vmatmul.mubr.bf16.gmra.mxu0 %v52
  %v88 = vpop.f32.mrf.mxu0
  %v89 = vadd.f32 %v42, %v88
  %v90 = vpop.f32.mrf.mxu0
  %v91 = vpop.f32.mrf.mxu0
  %v92 = vpop.f32.mrf.mxu0
  %93 = vdwg.mxu0
  %v94 = vmax.f32 %v89, 0.0
  %v95 = vpack.c.bf16 %v94, %v94
  %v96 = vld [vmem:[%s3] sm:$0xf]
  %v97 = vld [vmem:[%s3 + $0x4] sm:$0xf]
  %v98 = vld [vmem:[%s3 + $0x8] sm:$0xf]
  %v99 = vld [vmem:[%s3 + $0xc] sm:$0xf]
  %v100 = vld [vmem:[%s3 + $0x10] sm:$0xf]
  %v101 = vld [vmem:[%s3 + $0x14] sm:$0xf]
  %v102 = vld [vmem:[%s3 + $0x18] sm:$0xf]
  %v103 = vld [vmem:[%s3 + $0x1c] sm:$0xf]
  %v104 = vld [vmem:[%s3 + $0x20] sm:$0xf]
  %v105 = vld [vmem:[%s3 + $0x24] sm:$0xf]
  %v106 = vld [vmem:[%s3 + $0x28] sm:$0xf]
  %v107 = vld [vmem:[%s3 + $0x2c] sm:$0xf]
  %v108 = vld [vmem:[%s3 + $0x30] sm:$0xf]
  %v109 = vld [vmem:[%s3 + $0x34] sm:$0xf]
  %v110 = vld [vmem:[%s3 + $0x38] sm:$0xf]
  %v111 = vld [vmem:[%s3 + $0x3c] sm:$0xf]
  %v112 = vld [vmem:[%s4] sm:$0x1]
  %v114 = vlaneseq
  %v115 = vshrl.u32 %v114, 7
  %v116 = vsub.s32 0, %v115
  %v117 = vrot.slane %v112, %v116
  %v135 = vunpack.c.l.b16 %v96
  %v136 = vunpack.c.l.b16 %v97
  %v137 = vunpack.c.l.b16 %v98
  %v138 = vunpack.c.l.b16 %v99
  %v139 = vunpack.c.l.b16 %v100
  %v140 = vunpack.c.l.b16 %v101
  %v141 = vunpack.c.l.b16 %v102
  %v142 = vunpack.c.l.b16 %v103
  %v143 = vunpack.c.l.b16 %v104
  %v144 = vunpack.c.l.b16 %v105
  %v145 = vunpack.c.l.b16 %v106
  %v146 = vunpack.c.l.b16 %v107
  %v147 = vunpack.c.l.b16 %v108
  %v148 = vunpack.c.l.b16 %v109
  %v149 = vunpack.c.l.b16 %v110
  %v150 = vunpack.c.l.b16 %v111
  %v151 = vpack.c.b16 %v136, %v135
  %v152 = vpack.c.b16 %v138, %v137
  %v153 = vpack.c.b16 %v140, %v139
  %v154 = vpack.c.b16 %v142, %v141
  %v155 = vpack.c.b16 %v144, %v143
  %v156 = vpack.c.b16 %v146, %v145
  %v157 = vpack.c.b16 %v148, %v147
  %v158 = vpack.c.b16 %v150, %v149
  %167 = vmatprep.subr.bf16.mxu0 0
  %168 = vmatpush1.bf16.msra.mxu0 %v158
  %169 = vmatprep.subr.bf16.mxu0 0
  %170 = vmatpush1.bf16.msra.mxu0 %v157
  %171 = vmatprep.subr.bf16.mxu0 0
  %172 = vmatpush1.bf16.msra.mxu0 %v156
  %173 = vmatprep.subr.bf16.mxu0 0
  %174 = vmatpush1.bf16.msra.mxu0 %v155
  %175 = vmatprep.subr.bf16.mxu0 0
  %176 = vmatpush1.bf16.msra.mxu0 %v154
  %177 = vmatprep.subr.bf16.mxu0 0
  %178 = vmatpush1.bf16.msra.mxu0 %v153
  %179 = vmatprep.subr.bf16.mxu0 0
  %180 = vmatpush1.bf16.msra.mxu0 %v152
  %181 = vmatprep.subr.bf16.mxu0 0
  %182 = vmatpush1.bf16.msra.mxu0 %v151
  %183 = vmatprep.subr.bf16.mxu0 0
  %184 = vmatpush2.bf16.msra.mxu0 0
  %185 = vmatprep.subr.bf16.mxu0 0
  %186 = vmatpush2.bf16.msra.mxu0 0
  %187 = vmatprep.subr.bf16.mxu0 0
  %188 = vmatpush2.bf16.msra.mxu0 0
  %189 = vmatprep.subr.bf16.mxu0 0
  %190 = vmatpush2.bf16.msra.mxu0 0
  %191 = vmatprep.subr.bf16.mxu0 0
  %192 = vmatpush2.bf16.msra.mxu0 0
  %193 = vmatprep.subr.bf16.mxu0 0
  %194 = vmatpush2.bf16.msra.mxu0 0
  %195 = vmatprep.subr.bf16.mxu0 0
  %196 = vmatpush2.bf16.msra.mxu0 0
  %197 = vmatprep.subr.bf16.mxu0 0
  %198 = vmatpush2.bf16.msra.mxu0 0
  %199 = vmatprep.mubr.bf16.mxu0 0
  %200 = vmatmul.mubr.bf16.gmra.mxu0 %v95
  %v201 = vpop.f32.mrf.mxu0
  %v202 = vadd.f32 %v117, %v201
  %v203 = vpop.f32.mrf.mxu0
  %v204 = vpop.f32.mrf.mxu0
  %v205 = vpop.f32.mrf.mxu0
  %206 = vdwg.mxu0
  %v207 = vmax.f32 %v202, 0.0
  %v208 = vpack.c.bf16 %v207, %v207
  %v209 = vld [vmem:[%s5] sm:$0xf]
  %v210 = vld [vmem:[%s5 + $0x4] sm:$0xf]
  %v211 = vld [vmem:[%s5 + $0x8] sm:$0xf]
  %v212 = vld [vmem:[%s5 + $0xc] sm:$0xf]
  %v213 = vld [vmem:[%s5 + $0x10] sm:$0xf]
  %v214 = vld [vmem:[%s5 + $0x14] sm:$0xf]
  %v215 = vld [vmem:[%s5 + $0x18] sm:$0xf]
  %v216 = vld [vmem:[%s5 + $0x1c] sm:$0xf]
  %v217 = vld [vmem:[%s6] sm:$0x1]
  %v219 = vlaneseq
  %v220 = vshrl.u32 %v219, 7
  %v221 = vsub.s32 0, %v220
  %v222 = vrot.slane %v217, %v221
  %v232 = vunpack.c.l.b16 %v209
  %v233 = vunpack.c.l.b16 %v210
  %v234 = vunpack.c.l.b16 %v211
  %v235 = vunpack.c.l.b16 %v212
  %v236 = vunpack.c.l.b16 %v213
  %v237 = vunpack.c.l.b16 %v214
  %v238 = vunpack.c.l.b16 %v215
  %v239 = vunpack.c.l.b16 %v216
  %v240 = vpack.c.b16 %v233, %v232
  %v241 = vpack.c.b16 %v235, %v234
  %v242 = vpack.c.b16 %v237, %v236
  %v243 = vpack.c.b16 %v239, %v238
  %vm248 = vcmask 523264
  %v250 = vsel %vm248, %v208, 0
  %252 = vmatprep.subr.bf16.mxu0 0
  %253 = vmatpush1.bf16.msra.mxu0 0
  %254 = vmatprep.subr.bf16.mxu0 0
  %255 = vmatpush1.bf16.msra.mxu0 0
  %256 = vmatprep.subr.bf16.mxu0 0
  %257 = vmatpush1.bf16.msra.mxu0 0
  %258 = vmatprep.subr.bf16.mxu0 0
  %259 = vmatpush1.bf16.msra.mxu0 0
  %260 = vmatprep.subr.bf16.mxu0 0
  %261 = vmatpush1.bf16.msra.mxu0 %v243
  %262 = vmatprep.subr.bf16.mxu0 0
  %263 = vmatpush1.bf16.msra.mxu0 %v242
  %264 = vmatprep.subr.bf16.mxu0 0
  %265 = vmatpush1.bf16.msra.mxu0 %v241
  %266 = vmatprep.subr.bf16.mxu0 0
  %267 = vmatpush1.bf16.msra.mxu0 %v240
  %268 = vmatprep.subr.bf16.mxu0 0
  %269 = vmatpush2.bf16.msra.mxu0 0
  %270 = vmatprep.subr.bf16.mxu0 0
  %271 = vmatpush2.bf16.msra.mxu0 0
  %272 = vmatprep.subr.bf16.mxu0 0
  %273 = vmatpush2.bf16.msra.mxu0 0
  %274 = vmatprep.subr.bf16.mxu0 0
  %275 = vmatpush2.bf16.msra.mxu0 0
  %276 = vmatprep.subr.bf16.mxu0 0
  %277 = vmatpush2.bf16.msra.mxu0 0
  %278 = vmatprep.subr.bf16.mxu0 0
  %279 = vmatpush2.bf16.msra.mxu0 0
  %280 = vmatprep.subr.bf16.mxu0 0
  %281 = vmatpush2.bf16.msra.mxu0 0
  %282 = vmatprep.subr.bf16.mxu0 0
  %283 = vmatpush2.bf16.msra.mxu0 0
  %284 = vmatprep.mubr.bf16.mxu0 0
  %285 = vmatmul.mubr.bf16.gmra.mxu0 %v250
  %v286 = vpop.f32.mrf.mxu0
  %v287 = vadd.f32 %v222, %v286
  %v288 = vpop.f32.mrf.mxu0
  %v289 = vpop.f32.mrf.mxu0
  %v290 = vpop.f32.mrf.mxu0
  %291 = vdwg.mxu0
  %v292 = vmax.f32 %v287, 0.0
  %v293 = vpack.c.bf16 %v292, %v292
  %v294 = vld [vmem:[%s7] sm:$0xf]
  %v295 = vld [vmem:[%s7 + $0x4] sm:$0xf]
  %v296 = vld [vmem:[%s7 + $0x8] sm:$0xf]
  %v297 = vld [vmem:[%s7 + $0xc] sm:$0xf]
  %v298 = vld [vmem:[%s8] sm:$0x1]
  %v300 = vlaneseq
  %v301 = vshrl.u32 %v300, 7
  %v302 = vsub.s32 0, %v301
  %v303 = vrot.slane %v298, %v302
  %v309 = vunpack.c.l.b16 %v294
  %v310 = vunpack.c.l.b16 %v295
  %v311 = vunpack.c.l.b16 %v296
  %v312 = vunpack.c.l.b16 %v297
  %v313 = vpack.c.b16 %v310, %v309
  %v314 = vpack.c.b16 %v312, %v311
  %vm317 = vcmask 261120
  %v319 = vsel %vm317, %v293, 0
  %321 = vmatprep.subr.bf16.mxu0 0
  %322 = vmatpush1.bf16.msra.mxu0 0
  %323 = vmatprep.subr.bf16.mxu0 0
  %324 = vmatpush1.bf16.msra.mxu0 0
  %325 = vmatprep.subr.bf16.mxu0 0
  %326 = vmatpush1.bf16.msra.mxu0 0
  %327 = vmatprep.subr.bf16.mxu0 0
  %328 = vmatpush1.bf16.msra.mxu0 0
  %329 = vmatprep.subr.bf16.mxu0 0
  %330 = vmatpush1.bf16.msra.mxu0 0
  %331 = vmatprep.subr.bf16.mxu0 0
  %332 = vmatpush1.bf16.msra.mxu0 0
  %333 = vmatprep.subr.bf16.mxu0 0
  %334 = vmatpush1.bf16.msra.mxu0 %v314
  %335 = vmatprep.subr.bf16.mxu0 0
  %336 = vmatpush1.bf16.msra.mxu0 %v313
  %337 = vmatprep.subr.bf16.mxu0 0
  %338 = vmatpush2.bf16.msra.mxu0 0
  %339 = vmatprep.subr.bf16.mxu0 0
  %340 = vmatpush2.bf16.msra.mxu0 0
  %341 = vmatprep.subr.bf16.mxu0 0
  %342 = vmatpush2.bf16.msra.mxu0 0
  %343 = vmatprep.subr.bf16.mxu0 0
  %344 = vmatpush2.bf16.msra.mxu0 0
  %345 = vmatprep.subr.bf16.mxu0 0
  %346 = vmatpush2.bf16.msra.mxu0 0
  %347 = vmatprep.subr.bf16.mxu0 0
  %348 = vmatpush2.bf16.msra.mxu0 0
  %349 = vmatprep.subr.bf16.mxu0 0
  %350 = vmatpush2.bf16.msra.mxu0 0
  %351 = vmatprep.subr.bf16.mxu0 0
  %352 = vmatpush2.bf16.msra.mxu0 0
  %353 = vmatprep.mubr.bf16.mxu0 0
  %354 = vmatmul.mubr.bf16.gmra.mxu0 %v319
  %v355 = vpop.f32.mrf.mxu0
  %v356 = vadd.f32 %v303, %v355
  %v357 = vpop.f32.mrf.mxu0
  %v358 = vpop.f32.mrf.mxu0
  %v359 = vpop.f32.mrf.mxu0
  %360 = vdwg.mxu0
  %vm361 = vcmask 31744
  %362 = vst.msk [vmem:[%s9] sm:$0xff] %vm361, %v356
  // Predicated region
  $region38: #{value_network_forward.1} parent=0 // pred_check
    _
  $region39: #{value_network_forward.1} parent=0 // pred_check_branch
    %364 = sbr.rel (0) target = $region41
  $region40: #{value_network_forward.1} parent=0 // pred_region
    _
  $region41: #{value_network_forward.1} parent=0 // pred_fallthru
    _
  // Predicated region
  $region42: #{value_network_forward.1} parent=0 // pred_check
    _
  $region43: #{value_network_forward.1} parent=0 // pred_check_branch
    %366 = sbr.rel (0) target = $region45
  $region44: #{value_network_forward.1} parent=0 // pred_region
    _
  $region45: #{value_network_forward.1} parent=0 // pred_fallthru
    _

</llo_original>
